<compile_context>
chip_gen: v5e
topology: v5e:2x2
jax: 0.10.0
libtpu: 0.0.40
codegen_flags: <defaults>
</compile_context>

<pallas_src>
import functools

import jax
import jax.numpy as jnp
from jax.experimental import pallas as pl
from jax.experimental.pallas import tpu as pltpu


_LEAKY_SLOPE = 0.01  # nn.LeakyReLU default negative_slope


# ---------------------------------------------------------------------------
# Kernels
# ---------------------------------------------------------------------------
def _experts_kernel_f32out(x_ref, w1_ref, w2_ref, o_ref):
    """Tiled path, f32 output: accumulate directly into the resident output block.

    Grid = (expert, N-tile, H-tile); H (last axis) is the fused reduction.
      x_ref : (tN, Dp)  compute dtype, resident across H
      w1_ref: (Dp, tH)  compute dtype
      w2_ref: (tH, Dp)  compute dtype
      o_ref : (tN, Dp)  f32, resident across H (acts as the accumulator)
    """
    h = pl.program_id(2)
    hidden = jnp.dot(x_ref[...], w1_ref[...], preferred_element_type=jnp.float32)
    hidden = jnp.maximum(hidden, _LEAKY_SLOPE * hidden)  # LeakyReLU on f32 (VPU)
    partial = jnp.dot(hidden.astype(w2_ref.dtype), w2_ref[...],
                      preferred_element_type=jnp.float32)

    @pl.when(h == 0)
    def _init():
        o_ref[...] = partial

    @pl.when(h > 0)
    def _accum():
        o_ref[...] += partial


def _experts_kernel_scratch(x_ref, w1_ref, w2_ref, o_ref, acc_ref):
    """Tiled path, non-f32 output: accumulate in an f32 VMEM scratch."""
    h = pl.program_id(2)
    hidden = jnp.dot(x_ref[...], w1_ref[...], preferred_element_type=jnp.float32)
    hidden = jnp.maximum(hidden, _LEAKY_SLOPE * hidden)
    partial = jnp.dot(hidden.astype(w2_ref.dtype), w2_ref[...],
                      preferred_element_type=jnp.float32)

    @pl.when(h == 0)
    def _init():
        acc_ref[...] = partial

    @pl.when(h > 0)
    def _accum():
        acc_ref[...] += partial

    @pl.when(h == pl.num_programs(2) - 1)
    def _finalize():
        o_ref[...] = acc_ref[...].astype(o_ref.dtype)


def _experts_kernel_small(x_ref, w1_ref, w2_ref, o_ref):
    """Small-problem path: single grid step, whole arrays in VMEM, no padding."""
    @pl.loop(0, x_ref.shape[0])
    def _per_expert(e):
        hidden = jnp.dot(x_ref[e], w1_ref[e], preferred_element_type=jnp.float32)
        hidden = jnp.maximum(hidden, _LEAKY_SLOPE * hidden)
        out = jnp.dot(hidden.astype(w2_ref.dtype), w2_ref[e],
                      preferred_element_type=jnp.float32)
        o_ref[e] = out.astype(o_ref.dtype)


# ---------------------------------------------------------------------------
# Helpers
# ---------------------------------------------------------------------------
def _round_up(x: int, m: int) -> int:
    return (x + m - 1) // m * m


def _tpu_generation() -> int:
    try:
        kind = jax.devices()[0].device_kind.lower()
    except Exception:
        return 0
    for g in (7, 6, 5, 4):
        if f"v{g}" in kind:
            return g
    return 0


def _vmem_capacity_bytes(gen: int) -> int:
    try:
        return int(pltpu.get_tpu_info().vmem_capacity_bytes)
    except Exception:
        # v5e/v6e have 128 MiB; assume the conservative 64 MiB otherwise (v7x/unknown).
        return (128 if gen in (5, 6) else 64) * 1024 * 1024


def _pick_tile(total: int, cap: int, quantum: int) -> int:
    """Largest multiple of `quantum` <= cap that minimizes zero padding of `total`."""
    total_q = _round_up(total, quantum)
    cap_q = max(quantum, cap // quantum * quantum)
    if total_q <= cap_q:
        return total_q
    best_t = cap_q
    best_pad = _round_up(total_q, cap_q) - total_q
    t = cap_q - quantum
    lo = max(quantum, cap_q // 2)
    while t >= lo:
        pad = _round_up(total_q, t) - total_q
        if pad < best_pad:
            best_t, best_pad = t, pad
        t -= quantum
    return best_t


def _weight_spec(block_shape, index_map, buffer_count):
    """BlockSpec for a streamed weight, with deeper buffering where requested."""
    if buffer_count and buffer_count != 2:
        try:
            return pl.BlockSpec(block_shape, index_map,
                                pipeline_mode=pl.Buffered(buffer_count))
        except Exception:  # pipeline_mode not supported by this jax version
            pass
    return pl.BlockSpec(block_shape, index_map)


def _maybe_pad(a, pads):
    if any(hi for _, hi in pads):
        return jnp.pad(a, pads)
    return a


# ---------------------------------------------------------------------------
# Forward
# ---------------------------------------------------------------------------
@functools.partial(jax.jit, static_argnames=("compute_dtype",))
def experts_forward(x, layer1, layer2, *, compute_dtype=jnp.bfloat16):
    """Pallas implementation of Experts.forward.

    x: (E, N, D), layer1: (E, D, H), layer2: (E, H, D) -> (E, N, D) in x.dtype.
    """
    E, N, D = x.shape
    _, _, H = layer1.shape
    assert layer1.shape == (E, D, H)
    assert layer2.shape == (E, H, D)
    out_dtype = x.dtype
    itemsize = jnp.dtype(compute_dtype).itemsize
    out_itemsize = jnp.dtype(out_dtype).itemsize

    # TODO(synk): for production MoE layers, pre-cast / pre-pad the expert weights
    # once at parameter-load time rather than every forward call (kept in-wrapper
    # here to stay a drop-in replacement); casts are skipped when already matching.
    xc = x if x.dtype == compute_dtype else x.astype(compute_dtype)
    w1c = layer1 if layer1.dtype == compute_dtype else layer1.astype(compute_dtype)
    w2c = layer2 if layer2.dtype == compute_dtype else layer2.astype(compute_dtype)

    # ---------------- small-problem path ----------------
    small_bytes = ((xc.size + w1c.size + w2c.size) * itemsize
                   + E * N * H * 4 + E * N * D * out_itemsize)
    if small_bytes <= 2 * 1024 * 1024:
        return pl.pallas_call(
            _experts_kernel_small,
            out_shape=jax.ShapeDtypeStruct((E, N, D), out_dtype),
            in_specs=[pl.BlockSpec(memory_space=pltpu.MemorySpace.VMEM)] * 3,
            out_specs=pl.BlockSpec(memory_space=pltpu.MemorySpace.VMEM),
            cost_estimate=pl.CostEstimate(
                flops=4 * E * N * D * H,
                transcendentals=0,
                bytes_accessed=int(small_bytes)),
        )(xc, w1c, w2c)

    # ---------------- tiled path ----------------
    gen = _tpu_generation()
    vmem_cap = _vmem_capacity_bytes(gen)
    # ~108 MiB on 128 MiB parts (v5e/v6e), ~54 MiB on 64 MiB parts (v7x).
    vmem_budget = min(vmem_cap - 8 * 1024 * 1024, int(vmem_cap * 0.85))
    tn_target = {5: 384, 6: 640, 7: 512}.get(gen, 512)
    w_nbuf = 3 if gen == 5 else 2  # triple-buffer weight DMAs on v5e

    Dp = _round_up(D, 128)
    Np0 = _round_up(N, 8)
    Hp0 = _round_up(H, 128)

    acc_in_out = (out_dtype == jnp.float32)

    tN = _pick_tile(Np0, tn_target, 128 if Np0 >= 128 else 8)
    quantum_h = 256 if (Hp0 % 256 == 0 and Hp0 >= 256) else 128

    # Shrink tN if even a minimal H tile would not fit the VMEM budget.
    while True:
        fixed = (2 * tN * Dp * itemsize                    # x tile (double buffered)
                 + 2 * tN * Dp * out_itemsize              # out tile (double buffered)
                 + (0 if acc_in_out else tN * Dp * 4))     # f32 scratch (if any)
        per_col = (w_nbuf * 2 * Dp * itemsize              # w1 + w2 per H column
                   + tN * (4 + itemsize))                  # hidden f32 + bf16 copy
        w_budget = vmem_budget - fixed
        if w_budget >= quantum_h * per_col or tN <= 128:
            break
        tN = max(128, (tN // 2) // 8 * 8)

    th_cap = max(quantum_h, (max(w_budget, 0) // per_col) // quantum_h * quantum_h)
    tH = _pick_tile(Hp0, th_cap, quantum_h)

    Np = _round_up(Np0, tN)
    Hp = _round_up(Hp0, tH)

    # Zero padding is semantically neutral (zero rows/cols contribute zero and
    # LeakyReLU(0)==0); it is sliced off afterwards.  Pads are skipped when empty.
    xp = _maybe_pad(xc, ((0, 0), (0, Np - N), (0, Dp - D)))
    w1p = _maybe_pad(w1c, ((0, 0), (0, Dp - D), (0, Hp - H)))
    w2p = _maybe_pad(w2c, ((0, 0), (0, Hp - H), (0, Dp - D)))

    grid = (E, Np // tN, Hp // tH)

    # Weights are re-streamed once per N-tile; x / out move once per (expert, N-tile).
    bytes_accessed = E * (Np * Dp * itemsize
                          + (Np // tN) * 2 * Hp * Dp * itemsize
                          + Np * Dp * out_itemsize)
    cost = pl.CostEstimate(flops=4 * E * N * D * H, transcendentals=0,
                           bytes_accessed=int(bytes_accessed))

    in_specs = [
        # x / out index_maps ignore the H index -> resident across the reduction.
        pl.BlockSpec((pl.Squeezed(), tN, Dp), lambda e, n, h: (e, n, 0)),
        _weight_spec((pl.Squeezed(), Dp, tH), lambda e, n, h: (e, 0, h), w_nbuf),
        _weight_spec((pl.Squeezed(), tH, Dp), lambda e, n, h: (e, h, 0), w_nbuf),
    ]
    out_spec = pl.BlockSpec((pl.Squeezed(), tN, Dp), lambda e, n, h: (e, n, 0))

    if acc_in_out:
        kernel = _experts_kernel_f32out
        scratch_shapes = []
    else:
        kernel = _experts_kernel_scratch
        scratch_shapes = [pltpu.VMEM((tN, Dp), jnp.float32)]

    grid_spec = pltpu.PrefetchScalarGridSpec(
        num_scalar_prefetch=0,
        grid=grid,
        in_specs=in_specs,
        out_specs=out_spec,
        scratch_shapes=scratch_shapes,
    )

    out_padded = pl.pallas_call(
        kernel,
        out_shape=jax.ShapeDtypeStruct((E, Np, Dp), out_dtype),
        grid_spec=grid_spec,
        compiler_params=pltpu.CompilerParams(
            dimension_semantics=("parallel", "parallel", "arbitrary"),
            vmem_limit_bytes=int(vmem_budget),
        ),
        cost_estimate=cost,
    )(xp, w1p, w2p)

    if Np == N and Dp == D:
        return out_padded
    return out_padded[:, :N, :D]


def experts_reference(x, layer1, layer2, compute_dtype=jnp.float32):
    """Pure-JAX reference mirroring the PyTorch einsum semantics.

    compute_dtype=jnp.bfloat16 mirrors the kernel's bf16-compute / f32-accumulate
    numerics; compute_dtype=jnp.float32 is the exact module semantics.
    """
    xc = x.astype(compute_dtype)
    w1 = layer1.astype(compute_dtype)
    w2 = layer2.astype(compute_dtype)
    hidden = jnp.einsum("end,edh->enh", xc, w1,
                        preferred_element_type=jnp.float32)
    hidden = jnp.maximum(hidden, _LEAKY_SLOPE * hidden)  # LeakyReLU(0.01)
    out = jnp.einsum("enh,ehd->end", hidden.astype(compute_dtype), w2,
                     preferred_element_type=jnp.float32)
    return out.astype(x.dtype)


if __name__ == "__main__":
    # ---- Module-consistent small shapes: dim=32 -> hidden_dim=128, 6 experts ----
    E, D = 6, 32
    H = 4 * D
    N = 8

    key = jax.random.PRNGKey(0)
    kx, k1, k2 = jax.random.split(key, 3)
    layer1 = 0.02 * jax.random.truncated_normal(k1, -2.0, 2.0, (E, D, H), jnp.float32)
    layer2 = 0.02 * jax.random.truncated_normal(k2, -2.0, 2.0, (E, H, D), jnp.float32)
    x = jax.random.normal(kx, (E, N, D), jnp.float32)

    out = jax.block_until_ready(experts_forward(x, layer1, layer2))
    assert out.shape == (E, N, D)

    # Tight check vs a reference with matching bf16-compute / f32-accumulate numerics.
    ref_bf16 = experts_reference(x, layer1, layer2, compute_dtype=jnp.bfloat16)
    assert jnp.allclose(out, ref_bf16, atol=2e-4, rtol=2e-3), "mismatch vs bf16 reference"
    # Loose check vs the exact f32 module semantics (bf16 compute => ~1e-2 rel err).
    ref_f32 = experts_reference(x, layer1, layer2, compute_dtype=jnp.float32)
    assert jnp.allclose(out, ref_f32, atol=1e-2, rtol=5e-2), "mismatch vs f32 reference"

    # ---- Also exercise the tiled (large-shape) path at a modest size ----
    E2, N2, D2 = 2, 512, 256
    H2 = 4 * D2
    kx2, k3, k4 = jax.random.split(jax.random.PRNGKey(1), 3)
    w1b = 0.02 * jax.random.truncated_normal(k3, -2.0, 2.0, (E2, D2, H2), jnp.float32)
    w2b = 0.02 * jax.random.truncated_normal(k4, -2.0, 2.0, (E2, H2, D2), jnp.float32)
    xb = jax.random.normal(kx2, (E2, N2, D2), jnp.float32)

    outb = jax.block_until_ready(experts_forward(xb, w1b, w2b))
    assert outb.shape == (E2, N2, D2)
    refb = experts_reference(xb, w1b, w2b, compute_dtype=jnp.bfloat16)
    assert jnp.allclose(outb, refb, atol=1e-3, rtol=1e-2), "tiled-path mismatch"

    print("KERNEL_OK")
</pallas_src>

<mosaic_0001>
module attributes {stable_mosaic.version = 11 : i64} {
  func.func @_experts_kernel_small(%arg0: memref<6x8x32xbf16, #tpu.memory_space<vmem>>, %arg1: memref<6x32x128xbf16, #tpu.memory_space<vmem>>, %arg2: memref<6x128x32xbf16, #tpu.memory_space<vmem>>, %arg3: memref<6x8x32xf32, #tpu.memory_space<vmem>>) attributes {dimension_semantics = [], scalar_prefetch = 0 : i64, scratch_operands = 0 : i64, tpu.core_type = #tpu.core_type<tc>} {
    %c0_i32 = arith.constant 0 : i32
    %c6_i32 = arith.constant 6 : i32
    %0 = arith.addi %c0_i32, %c6_i32 : i32
    %c1_i32 = arith.constant 1 : i32
    scf.for %arg4 = %c0_i32 to %0 step %c1_i32  : i32 {
      %c1_i32_1 = arith.constant 1 : i32
      %1 = arith.muli %arg4, %c1_i32_1 : i32
      %c0_i32_2 = arith.constant 0 : i32
      %2 = arith.addi %c0_i32_2, %1 : i32
      %3 = arith.index_cast %2 : i32 to index
      %c0 = arith.constant 0 : index
      %c0_3 = arith.constant 0 : index
      %4 = vector.load %arg0[%3, %c0, %c0_3] : memref<6x8x32xbf16, #tpu.memory_space<vmem>>, vector<1x8x32xbf16>
      %5 = vector.shape_cast %4 : vector<1x8x32xbf16> to vector<8x32xbf16>
      %6 = arith.index_cast %2 : i32 to index
      %c0_4 = arith.constant 0 : index
      %c0_5 = arith.constant 0 : index
      %7 = vector.load %arg1[%6, %c0_4, %c0_5] : memref<6x32x128xbf16, #tpu.memory_space<vmem>>, vector<1x32x128xbf16>
      %8 = vector.shape_cast %7 : vector<1x32x128xbf16> to vector<32x128xbf16>
      %cst = arith.constant dense<0.000000e+00> : vector<8x128xf32>
      %9 = tpu.matmul %5, %8, %cst {dimension_numbers = #tpu.dot_dimension_numbers<[1], [0], [0], [1], [0, 0, 1, 1], [], []>} : vector<8x32xbf16>, vector<32x128xbf16>, vector<8x128xf32> -> vector<8x128xf32>
      %cst_6 = arith.constant 0.00999999977 : f32
      %10 = vector.broadcast %cst_6 : f32 to vector<8x128xf32>
      %11 = arith.mulf %10, %9 : vector<8x128xf32>
      %12 = arith.maximumf %9, %11 : vector<8x128xf32>
      %13 = arith.truncf %12 : vector<8x128xf32> to vector<8x128xbf16>
      %14 = arith.index_cast %2 : i32 to index
      %c0_7 = arith.constant 0 : index
      %c0_8 = arith.constant 0 : index
      %15 = vector.load %arg2[%14, %c0_7, %c0_8] : memref<6x128x32xbf16, #tpu.memory_space<vmem>>, vector<1x128x32xbf16>
      %16 = vector.shape_cast %15 : vector<1x128x32xbf16> to vector<128x32xbf16>
      %cst_9 = arith.constant dense<0.000000e+00> : vector<8x32xf32>
      %17 = tpu.matmul %13, %16, %cst_9 {dimension_numbers = #tpu.dot_dimension_numbers<[1], [0], [0], [1], [0, 0, 1, 1], [], []>} : vector<8x128xbf16>, vector<128x32xbf16>, vector<8x32xf32> -> vector<8x32xf32>
      %18 = arith.index_cast %2 : i32 to index
      %c0_10 = arith.constant 0 : index
      %c0_11 = arith.constant 0 : index
      %19 = vector.load %arg3[%18, %c0_10, %c0_11] : memref<6x8x32xf32, #tpu.memory_space<vmem>>, vector<1x8x32xf32>
      %20 = vector.shape_cast %19 : vector<1x8x32xf32> to vector<8x32xf32>
      %21 = vector.shape_cast %17 : vector<8x32xf32> to vector<1x8x32xf32>
      tpu.vector_store %arg3[%18, %c0_10, %c0_11], %21 {strides = array<i32>} : memref<6x8x32xf32, #tpu.memory_space<vmem>>, vector<1x8x32xf32>,
    }
    %c6_i32_0 = arith.constant 6 : i32
    return
  }
}

</mosaic_0001>

<llo_original>
// kernel: experts_forward.1
$region0: #{experts_forward.1}
  #allocation0 [shape = 'u32[]', space=smem, size = 0x4, offset = 0x4, fixed_abs, tag = 'smem constant byte address 0x4 - core index']
  #allocation1 [shape = 'u32[72,128]{1,0:T(1,128)}', space=vmem, size = 0x9000, scoped, tag = 'internal scratch']
  %s0 = inlined_call_operand.vmem [shape: bf16[6,8,32], index: 0, kind: input, shape index: {}]
  %s1 = inlined_call_operand.vmem [shape: bf16[6,32,128], index: 1, kind: input, shape index: {}]
  %s2 = inlined_call_operand.vmem [shape: bf16[6,128,32], index: 2, kind: input, shape index: {}]
  %s3 = inlined_call_operand.hbm [shape: f32[6,8,32], index: 3, kind: output, shape index: {}]
  %s4 = sld [smem:[#allocation0]]
  $region29: #{experts_forward.1} parent=0
    _
  %s6 = ssub.s32 1, %s4
  %s7 = scalar_select 0, %s6, %s4
  $region1: #{experts_forward.1} parent=0
    #allocation2 [shape = 'u8[24576]{0}', space=vmem, size = 0x6000, scoped, tag = 'output window, operand 0, single buffered']
    #allocation3 [shape = 's32[1]{0}', space=sflag, size = 0x4, scoped, tag = 'scoped memory for experts_forward.1']
    %8 = vsyncpa [#allocation3], 0
    // Predicated region
    $region2: #{experts_forward.1} parent=1 // pred_check
      _
    $region3: #{experts_forward.1} parent=1 // pred_check_branch
      %10 = sbr.rel (0) target = $region5
    $region4: #{experts_forward.1} parent=1 // pred_region
      _
    $region5: #{experts_forward.1} parent=1 // pred_fallthru
      _
    // Predicated region
    $region6: #{experts_forward.1} parent=1 // pred_check
      _
    $region7: #{experts_forward.1} parent=1 // pred_check_branch
      %12 = sbr.rel (0) target = $region9
    $region8: #{experts_forward.1} parent=1 // pred_region
      _
    $region9: #{experts_forward.1} parent=1 // pred_fallthru
      _
    // Predicated region
    $region10: #{experts_forward.1} parent=1 // pred_check
      _
    $region11: #{experts_forward.1} parent=1 // pred_check_branch
      %14 = sbr.rel (0) target = $region13
    $region12: #{experts_forward.1} parent=1 // pred_region
      _
    $region13: #{experts_forward.1} parent=1 // pred_fallthru
      _
    loop: start=0, step=1, limit=6
    $region14: #{experts_forward.1} parent=1 // loop_pre_header
      _
    $region15: #{experts_forward.1} parent=1 // loop_header
      %s17 = sphi 0, %s21
      %p18 = scmp.ge.s32.totalorder %s17, 6
    $region16: #{experts_forward.1} parent=1 // loop_header_branch
      %20 = sbr.rel (%p18) target = $region20
    $region17: #{experts_forward.1} parent=1 // loop_body
      %s22 = smul.addr %s17, 4
      %s23 = scalar_lea.vmem %s0, %s22
      %v24 = vld [vmem:[%s23] sm:$0xf]
      %s25 = smul.u32 %s17, 4
      %s26 = smul.addr %s25, 4
      %s27 = scalar_lea.vmem %s1, %s26
      %v28 = vld [vmem:[%s27] sm:$0xf]
      %v29 = vld [vmem:[%s27 + $0x4] sm:$0xf]
      %v30 = vld [vmem:[%s27 + $0x8] sm:$0xf]
      %v31 = vld [vmem:[%s27 + $0xc] sm:$0xf]
      %v36 = vunpack.c.l.b16 %v28
      %v37 = vunpack.c.l.b16 %v29
      %v38 = vunpack.c.l.b16 %v30
      %v39 = vunpack.c.l.b16 %v31
      %v40 = vpack.c.b16 %v37, %v36
      %v41 = vpack.c.b16 %v39, %v38
      %vm44 = vcmask 261120
      %v46 = vsel %vm44, %v24, 0
      %48 = vmatpush.bf16.msra.mxu0 0
      %49 = vmatpush.bf16.msra.mxu0 0
      %50 = vmatpush.bf16.msra.mxu0 0
      %51 = vmatpush.bf16.msra.mxu0 0
      %52 = vmatpush.bf16.msra.mxu0 0
      %53 = vmatpush.bf16.msra.mxu0 0
      %54 = vmatpush.bf16.msra.mxu0 %v41
      %55 = vmatpush.bf16.msra.mxu0 %v40
      %56 = vmatmul.bf16.gmra.mxu0 %v46
      %v57 = vpop.f32.mrf.mxu0
      %v58 = vadd.f32 0.0, %v57
      %v59 = vpop.f32.mrf.mxu0
      %60 = vdwg.mxu0
      %v61 = vmul.f32 %v58, 0.01
      %v62 = vmax.f32 %v58, %v61
      %v63 = vpack.c.bf16 %v62, %v62
      %s64 = smul.u32 %s17, 16
      %s65 = smul.addr %s64, 4
      %s66 = scalar_lea.vmem %s2, %s65
      %v67 = vld [vmem:[%s66] sm:$0xf]
      %v68 = vld [vmem:[%s66 + $0x4] sm:$0xf]
      %v69 = vld [vmem:[%s66 + $0x8] sm:$0xf]
      %v70 = vld [vmem:[%s66 + $0xc] sm:$0xf]
      %v71 = vld [vmem:[%s66 + $0x10] sm:$0xf]
      %v72 = vld [vmem:[%s66 + $0x14] sm:$0xf]
      %v73 = vld [vmem:[%s66 + $0x18] sm:$0xf]
      %v74 = vld [vmem:[%s66 + $0x1c] sm:$0xf]
      %v75 = vld [vmem:[%s66 + $0x20] sm:$0xf]
      %v76 = vld [vmem:[%s66 + $0x24] sm:$0xf]
      %v77 = vld [vmem:[%s66 + $0x28] sm:$0xf]
      %v78 = vld [vmem:[%s66 + $0x2c] sm:$0xf]
      %v79 = vld [vmem:[%s66 + $0x30] sm:$0xf]
      %v80 = vld [vmem:[%s66 + $0x34] sm:$0xf]
      %v81 = vld [vmem:[%s66 + $0x38] sm:$0xf]
      %v82 = vld [vmem:[%s66 + $0x3c] sm:$0xf]
      %v99 = vunpack.c.l.b16 %v67
      %v100 = vunpack.c.l.b16 %v68
      %v101 = vunpack.c.l.b16 %v69
      %v102 = vunpack.c.l.b16 %v70
      %v103 = vunpack.c.l.b16 %v71
      %v104 = vunpack.c.l.b16 %v72
      %v105 = vunpack.c.l.b16 %v73
      %v106 = vunpack.c.l.b16 %v74
      %v107 = vunpack.c.l.b16 %v75
      %v108 = vunpack.c.l.b16 %v76
      %v109 = vunpack.c.l.b16 %v77
      %v110 = vunpack.c.l.b16 %v78
      %v111 = vunpack.c.l.b16 %v79
      %v112 = vunpack.c.l.b16 %v80
      %v113 = vunpack.c.l.b16 %v81
      %v114 = vunpack.c.l.b16 %v82
      %v115 = vpack.c.b16 %v100, %v99
      %v116 = vpack.c.b16 %v102, %v101
      %v117 = vpack.c.b16 %v104, %v103
      %v118 = vpack.c.b16 %v106, %v105
      %v119 = vpack.c.b16 %v108, %v107
      %v120 = vpack.c.b16 %v110, %v109
      %v121 = vpack.c.b16 %v112, %v111
      %v122 = vpack.c.b16 %v114, %v113
      %131 = vmatpush.bf16.msra.mxu0 %v122
      %132 = vmatpush.bf16.msra.mxu0 %v121
      %133 = vmatpush.bf16.msra.mxu0 %v120
      %134 = vmatpush.bf16.msra.mxu0 %v119
      %135 = vmatpush.bf16.msra.mxu0 %v118
      %136 = vmatpush.bf16.msra.mxu0 %v117
      %137 = vmatpush.bf16.msra.mxu0 %v116
      %138 = vmatpush.bf16.msra.mxu0 %v115
      %139 = vmatmul.bf16.gmra.mxu0 %v63
      %v140 = vpop.f32.mrf.mxu0
      %v141 = vadd.f32 0.0, %v140
      %v142 = vpop.f32.mrf.mxu0
      %143 = vdwg.mxu0
      %s144 = smul.u32 %s17, 8
      %s145 = scalar_lea.vmem [#allocation2], %s144
      %146 = vst.msk [vmem:[%s145] sm:$0xff] %vm44, %v141
    $region18: #{experts_forward.1} parent=1 // loop_footer
      %s21 = sadd.s32 1, %s17
    $region19: #{experts_forward.1} parent=1 // loop_footer_branch
      %16 = sbr.rel target = $region15
    $region20: #{experts_forward.1} parent=1 // loop_exit
      _
    // Predicated region
    $region21: #{experts_forward.1} parent=1 // pred_check
      _
    $region22: #{experts_forward.1} parent=1 // pred_check_branch
      %148 = sbr.rel (0) target = $region24
    $region23: #{experts_forward.1} parent=1 // pred_region
      %150 = vsyncadd [#allocation3], 0
      %s151 = sshll.u32 [#allocation2], 4
      %s152 = int_to_ptr.vmem [resolvable:$true] %s151
      %s153 = sshll.u32 %s3, 4
      %s154 = int_to_ptr.hbm [resolvable:$true] %s153
      %159 = dma.vmem_to_hbm [thread:$0]  %s152, 768, %s154, [#allocation3], 128, 128, 8
    $region24: #{experts_forward.1} parent=1 // pred_fallthru
      _
    // Predicated region
    $region25: #{experts_forward.1} parent=1 // pred_check
      _
    $region26: #{experts_forward.1} parent=1 // pred_check_branch
      %161 = sbr.rel (0) target = $region28
    $region27: #{experts_forward.1} parent=1 // pred_region
      %163 = dma.done [#allocation3], 768
    $region28: #{experts_forward.1} parent=1 // pred_fallthru
      _
    %164 = vsyncpa [#allocation3], 1

</llo_original>
